<compile_context>
chip_gen: v7x
topology: tpu7x:2x2x1
jax: 0.10.0
libtpu: 0.0.40
codegen_flags: <defaults>
</compile_context>

<pallas_src>
import functools
import math

import jax
import jax.numpy as jnp
from jax.experimental import pallas as pl
from jax.experimental.pallas import tpu as pltpu


def make_positional_encoding(d_model: int, seq_len: int,
                             dtype=jnp.float32) -> jnp.ndarray:
    """Deterministic sin/cos positional encoding, shape [seq_len, d_model]."""
    assert d_model % 2 == 0, "d_model must be even (same as the PyTorch module)"
    position = jnp.arange(seq_len, dtype=jnp.float32)[:, None]          # [S, 1]
    div_term = jnp.exp(
        jnp.arange(0, d_model, 2, dtype=jnp.float32)
        * (-math.log(10000.0) / d_model)
    )                                                                    # [D/2]
    pe = jnp.zeros((seq_len, d_model), dtype=jnp.float32)
    pe = pe.at[:, 0::2].set(jnp.sin(position * div_term))
    pe = pe.at[:, 1::2].set(jnp.cos(position * div_term))
    return pe.astype(dtype)                                              # [S, D]


def _add_pe_kernel(x_ref, pe_ref, o_ref, *, batch: int):
    # x_ref, o_ref: (seq_block, batch * d_model)  -- lane-dense 2-D tiles
    # pe_ref      : (seq_block, d_model)
    pe = pe_ref[...]
    # Broadcast pe across the batch groups packed along the lane axis.
    pe_full = jnp.concatenate([pe] * batch, axis=1) if batch > 1 else pe
    o_ref[...] = x_ref[...] + pe_full


def _choose_seq_block(seq_len: int, row_bytes: int,
                      target_tile_bytes: int = 4 << 20) -> int:
    """Pick rows-per-tile from a VMEM budget; multiple of 8 (or full seq)."""
    max_rows = max(8, target_tile_bytes // max(row_bytes, 1))
    # Prefer >=2 grid steps so v7x's two TensorCores both get work.
    if seq_len >= 16:
        max_rows = min(max_rows, max(8, seq_len // 2))
    if seq_len <= max_rows:
        return seq_len
    cand = (max_rows // 8) * 8
    while cand >= 8:
        if seq_len % cand == 0:
            return cand
        cand -= 8
    # No clean multiple-of-8 divisor: fall back to the full sequence (block
    # equal to the array dim is always a legal tiling).
    return seq_len


def positional_encoding_1d(x: jnp.ndarray, pe: jnp.ndarray) -> jnp.ndarray:
    """Forward of PositionalEncoding1D (dropout p=0.0 -> identity): x + pe.

    x : [seq_len, batch, d_model]
    pe: [seq_len, d_model] or [seq_len, 1, d_model]  (broadcast over batch)
    Note: seq_len is tiled with a divisor block; arbitrary seq_len falls back
    to a single full-length block.
    """
    seq_len, batch, d_model = x.shape
    if pe.ndim == 3:
        pe = pe.reshape(seq_len, d_model)
    pe = pe.astype(x.dtype)                       # avoid f32 upcast path for bf16 x

    # Free reshape (contiguous minor-dim merge): [S, B, D] -> [S, B*D].
    x2 = x.reshape(seq_len, batch * d_model)

    itemsize = jnp.dtype(x.dtype).itemsize
    row_bytes = batch * d_model * itemsize
    seq_block = _choose_seq_block(seq_len, row_bytes)
    assert seq_len % seq_block == 0

    tile_bytes = seq_block * row_bytes
    pe_tile_bytes = seq_block * d_model * itemsize
    # Double-buffered x + out + pe tiles, plus margin; at least 32 MiB so the
    # v5e (16 MiB) scoped default never silently shrinks buffering. Safe on
    # v7x (64 MiB physical) since tiles are capped at ~4 MiB.
    vmem_limit = int(max(2 * (2 * tile_bytes + pe_tile_bytes) + (2 << 20),
                         32 << 20))

    grid = (seq_len // seq_block,)
    out2 = pl.pallas_call(
        functools.partial(_add_pe_kernel, batch=batch),
        out_shape=jax.ShapeDtypeStruct((seq_len, batch * d_model), x.dtype),
        grid=grid,
        in_specs=[
            pl.BlockSpec((seq_block, batch * d_model), lambda i: (i, 0)),
            pl.BlockSpec((seq_block, d_model), lambda i: (i, 0)),
        ],
        out_specs=pl.BlockSpec((seq_block, batch * d_model), lambda i: (i, 0)),
        compiler_params=pltpu.CompilerParams(
            dimension_semantics=("parallel",),
            vmem_limit_bytes=vmem_limit,
        ),
    )(x2, pe)
    return out2.reshape(seq_len, batch, d_model)


if __name__ == "__main__":
    seq_len, batch, d_model = 8, 2, 32
    key = jax.random.PRNGKey(0)
    x = jax.random.normal(key, (seq_len, batch, d_model), dtype=jnp.float32)

    pe = make_positional_encoding(d_model, seq_len, dtype=x.dtype)   # [S, D]

    out = positional_encoding_1d(x, pe)
    out = jax.block_until_ready(out)

    # Reference check (dropout p=0.0 -> identity, pe broadcast over batch).
    ref = x + pe[:, None, :]
    assert out.shape == (seq_len, batch, d_model)
    assert jnp.allclose(out, ref, atol=1e-6), "mismatch vs reference"

    print("KERNEL_OK")
</pallas_src>

<mosaic_0001>
module attributes {stable_mosaic.version = 11 : i64} {
  func.func @_add_pe_kernel(%arg0: i32, %arg1: memref<8x64xf32, #tpu.memory_space<vmem>>, %arg2: memref<8x32xf32, #tpu.memory_space<vmem>>, %arg3: memref<8x64xf32, #tpu.memory_space<vmem>>) attributes {dimension_semantics = [#tpu.dimension_semantics<parallel>], iteration_bounds = array<i64: 1>, scalar_prefetch = 0 : i64, scratch_operands = 0 : i64, tpu.core_type = #tpu.core_type<tc>, window_params = [{transform_indices = @transform_0, window_bounds = array<i64: 8, 64>}, {transform_indices = @transform_1, window_bounds = array<i64: 8, 32>}, {transform_indices = @transform_2, window_bounds = array<i64: 8, 64>}]} {
    %c0 = arith.constant 0 : index
    %c0_0 = arith.constant 0 : index
    %0 = vector.load %arg2[%c0, %c0_0] : memref<8x32xf32, #tpu.memory_space<vmem>>, vector<8x32xf32>
    %1 = tpu.concatenate %0, %0 in 1 : vector<8x32xf32>, vector<8x32xf32> -> vector<8x64xf32>
    %c0_1 = arith.constant 0 : index
    %c0_2 = arith.constant 0 : index
    %2 = vector.load %arg1[%c0_1, %c0_2] : memref<8x64xf32, #tpu.memory_space<vmem>>, vector<8x64xf32>
    %3 = arith.addf %2, %1 : vector<8x64xf32>
    %c0_3 = arith.constant 0 : index
    %c0_4 = arith.constant 0 : index
    %4 = vector.load %arg3[%c0_3, %c0_4] : memref<8x64xf32, #tpu.memory_space<vmem>>, vector<8x64xf32>
    tpu.vector_store %arg3[%c0_3, %c0_4], %3 {strides = array<i32>} : memref<8x64xf32, #tpu.memory_space<vmem>>, vector<8x64xf32>,
    return
  }
  func.func @transform_0(%arg0: i32) -> (i32, i32) {
    %c0_i32 = arith.constant 0 : i32
    %c0_i32_0 = arith.constant 0 : i32
    return %arg0, %c0_i32 : i32, i32
  }
  func.func @transform_1(%arg0: i32) -> (i32, i32) {
    %c0_i32 = arith.constant 0 : i32
    %c0_i32_0 = arith.constant 0 : i32
    return %arg0, %c0_i32 : i32, i32
  }
  func.func @transform_2(%arg0: i32) -> (i32, i32) {
    %c0_i32 = arith.constant 0 : i32
    %c0_i32_0 = arith.constant 0 : i32
    return %arg0, %c0_i32 : i32, i32
  }
}

</mosaic_0001>

<llo_original>
// kernel: tpu_custom_call.1
$region0: #{tpu_custom_call.1}
  #allocation0 [shape = 'u32[]', space=smem, size = 0x4, offset = 0x4, fixed_abs, tag = 'smem constant byte address 0x4 - core index']
  #allocation1 [shape = 'u32[144,128]{1,0:T(1,128)}', space=vmem, size = 0x12000, scoped, tag = 'internal scratch']
  %s0 = inlined_call_operand.hbm [shape: f32[8,64], index: 0, kind: input, shape index: {}]
  %s1 = inlined_call_operand.hbm [shape: f32[8,32], index: 1, kind: input, shape index: {}]
  %s2 = inlined_call_operand.hbm [shape: f32[8,64], index: 2, kind: output, shape index: {}]
  %s3 = sld [smem:[#allocation0]]
  $region26: #{tpu_custom_call.1} parent=0
    _
  %s5 = ssub.s32 1, %s3
  %s6 = scalar_select 0, %s5, %s3
  $region1: #{tpu_custom_call.1} parent=0
    #allocation2 [shape = 'u8[4096]{0}', space=vmem, size = 0x1000, scoped, tag = 'input window, operand 0, single buffered']
    #allocation3 [shape = 's32[1]{0}', space=sflag, size = 0x4, scoped, tag = 'scoped memory for tpu_custom_call.1']
    #allocation4 [shape = 's32[1]{0}', space=sflag, size = 0x4, scoped, tag = 'scoped memory for tpu_custom_call.1']
    #allocation5 [shape = 'u8[4096]{0}', space=vmem, size = 0x1000, scoped, tag = 'input window, operand 1, single buffered']
    #allocation6 [shape = 's32[1]{0}', space=sflag, size = 0x4, scoped, tag = 'scoped memory for tpu_custom_call.1']
    #allocation7 [shape = 'u8[4096]{0}', space=vmem, size = 0x1000, scoped, tag = 'output window, operand 0, single buffered']
    %7 = vsyncpa [#allocation3], 0
    %8 = vsyncpa [#allocation6], 0
    %9 = vsyncpa [#allocation4], 0
    // Predicated region
    $region2: #{tpu_custom_call.1} parent=1 // pred_check
      _
    $region3: #{tpu_custom_call.1} parent=1 // pred_check_branch
      %11 = sbr.rel (0) target = $region5
    $region4: #{tpu_custom_call.1} parent=1 // pred_region
      %s13 = ssub.s32 128, 128
      %14 = vsyncadd [#allocation3], %s13
      %s16 = sshll.u32 [#allocation2], 4
      %s17 = int_to_ptr.vmem [resolvable:$true] %s16
      %19 = dma.hbm_to_vmem [thread:$0]  %s0, 128, %s17, [#allocation3]
    $region5: #{tpu_custom_call.1} parent=1 // pred_fallthru
      _
    // Predicated region
    $region6: #{tpu_custom_call.1} parent=1 // pred_check
      _
    $region7: #{tpu_custom_call.1} parent=1 // pred_check_branch
      %21 = sbr.rel (0) target = $region9
    $region8: #{tpu_custom_call.1} parent=1 // pred_region
      %s23 = ssub.s32 128, 128
      %24 = vsyncadd [#allocation6], %s23
      %s26 = sshll.u32 [#allocation5], 4
      %s27 = int_to_ptr.vmem [resolvable:$true] %s26
      %29 = dma.hbm_to_vmem [thread:$0]  %s1, 128, %s27, [#allocation6]
    $region9: #{tpu_custom_call.1} parent=1 // pred_fallthru
      _
    // Predicated region
    $region10: #{tpu_custom_call.1} parent=1 // pred_check
      _
    $region11: #{tpu_custom_call.1} parent=1 // pred_check_branch
      %31 = sbr.rel (0) target = $region13
    $region12: #{tpu_custom_call.1} parent=1 // pred_region
      %32 = dma.done [#allocation3], 128
    $region13: #{tpu_custom_call.1} parent=1 // pred_fallthru
      _
    // Predicated region
    $region14: #{tpu_custom_call.1} parent=1 // pred_check
      _
    $region15: #{tpu_custom_call.1} parent=1 // pred_check_branch
      %34 = sbr.rel (0) target = $region17
    $region16: #{tpu_custom_call.1} parent=1 // pred_region
      %35 = dma.done [#allocation6], 128
    $region17: #{tpu_custom_call.1} parent=1 // pred_fallthru
      _
    %v36 = vld [vmem:[#allocation5] sm:$0xff]
    %38 = vrot.lane.b32.xlu0 %v36, 32
    %v39 = vpop.permute.xlu0 %38
    %vm41 = vcmask 261120
    %v42 = vsel %vm41, %v36, %v39
    %v43 = vld [vmem:[#allocation2] sm:$0xff]
    %v44 = vadd.f32 %v43, %v42
    %vm45 = vcmask 523264
    %46 = vst.msk [vmem:[#allocation7] sm:$0xff] %vm45, %v44
    // Predicated region
    $region18: #{tpu_custom_call.1} parent=1 // pred_check
      _
    $region19: #{tpu_custom_call.1} parent=1 // pred_check_branch
      %48 = sbr.rel (0) target = $region21
    $region20: #{tpu_custom_call.1} parent=1 // pred_region
      %s50 = ssub.s32 128, 128
      %51 = vsyncadd [#allocation4], %s50
      %s53 = sshll.u32 [#allocation7], 4
      %s54 = int_to_ptr.vmem [resolvable:$true] %s53
      %56 = dma.vmem_to_hbm [thread:$0]  %s54, 128, %s2, [#allocation4]
    $region21: #{tpu_custom_call.1} parent=1 // pred_fallthru
      _
    // Predicated region
    $region22: #{tpu_custom_call.1} parent=1 // pred_check
      _
    $region23: #{tpu_custom_call.1} parent=1 // pred_check_branch
      %58 = sbr.rel (0) target = $region25
    $region24: #{tpu_custom_call.1} parent=1 // pred_region
      %59 = dma.done [#allocation4], 128
    $region25: #{tpu_custom_call.1} parent=1 // pred_fallthru
      _
    %60 = vsyncpa [#allocation3], 1
    %61 = vsyncpa [#allocation6], 1
    %62 = vsyncpa [#allocation4], 1

</llo_original>
